<compile_context>
chip_gen: v6e
topology: v6e:2x2x1
jax: 0.10.0
libtpu: 0.0.40
codegen_flags: <defaults>
</compile_context>

<pallas_src>
from functools import partial

import jax
import jax.numpy as jnp
from jax import lax
from jax.experimental import pallas as pl
from jax.experimental.pallas import tpu as pltpu


_MASK_TILE_BYTES = 1 << 20    # ~1 MiB of uniform draw per mask-kernel step
_APPLY_TILE_BYTES = 2 << 20   # ~2 MiB of x per apply-kernel step: double-buffered
                              # in + out + mask stays well under v5e's 16 MiB
                              # default scoped VMEM (and far under v7x's 64 MiB).


def _padded_dims(H, W, block_size):
    """Padding of F.max_pool2d(stride=1, padding=bs//2), incl. the even-bs crop."""
    lo = block_size // 2
    hi = block_size - 1 - lo
    return lo, H + lo + hi, W + lo + hi


def _largest_divisor_at_most(n, cap):
    cap = int(max(1, min(n, cap)))
    for d in range(cap, 0, -1):
        if n % d == 0:
            return d
    return 1


def _pick_channel_block(C, HW, budget_bytes):
    """Largest channel block that (a) divides C, (b) keeps CB*HW*4 <= budget,
    (c) is a multiple of 8 when it is a strict sub-block (BlockSpec (8,128) rule)."""
    per_c = HW * 4
    if C * per_c <= budget_bytes or C <= 8:
        return C
    cap = budget_bytes // per_c
    for cb in range(int(min(C - 1, cap)), 7, -1):
        if C % cb == 0 and cb % 8 == 0:
            return cb
    return C   # no legal split found; keep full channels


# ------------------------------ kernel 1: block mask ------------------------------

def _mask_kernel(rand_ref, bm_ref, sum_ref, *, H, W, bs, gamma):
    """(MB, Hp, Wp) uniforms -> (MB, H, W) block mask + one partial sum."""
    lo = bs // 2
    MB, Hp, Wp = rand_ref.shape

    r = rand_ref[...]
    # Bernoulli(gamma) seeds on the interior; the halo (max-pool padding) is 0,
    # which is equivalent to -inf padding for a 0/1 mask because the centre tap
    # of every pooling window is always in-bounds.
    ri = lax.broadcasted_iota(jnp.int32, (MB, Hp, Wp), 1)
    ci = lax.broadcasted_iota(jnp.int32, (MB, Hp, Wp), 2)
    interior = (ri >= lo) & (ri < lo + H) & (ci >= lo) & (ci < lo + W)
    seed = jnp.where(interior & (r < gamma), jnp.float32(1.0), jnp.float32(0.0))

    # Separable stride-1 max pool of width bs (rows, then cols), fully unrolled.
    rowmax = seed[:, 0:H, :]
    for d in range(1, bs):
        rowmax = jnp.maximum(rowmax, seed[:, d:d + H, :])
    pooled = rowmax[:, :, 0:W]
    for d in range(1, bs):
        pooled = jnp.maximum(pooled, rowmax[:, :, d:d + W])

    block_mask = 1.0 - pooled                        # (MB, H, W) in {0, 1}
    bm_ref[...] = block_mask

    # Per-chunk partial sum, broadcast along the lane dim (unmasked 128-wide store).
    s = jnp.sum(block_mask, axis=2, keepdims=True)
    s = jnp.sum(s, axis=1, keepdims=True)
    s = jnp.sum(s, axis=0, keepdims=True)            # (1, 1, 1)
    sum_ref[...] = jnp.zeros((1, 1, 128), jnp.float32) + s


# ------------------------------ kernel 2: fused apply -----------------------------

def _apply_kernel(scale_ref, x_ref, bm_ref, o_ref):
    # Fold the rescale into the (C-times smaller) mask: 1 vmul per x element.
    m = bm_ref[...] * scale_ref[0]                   # (TB, 1, HW)
    o_ref[...] = (x_ref[...] * m).astype(o_ref.dtype)


# --------------------------------- module wrapper ---------------------------------

def dropblock2d(x, drop_prob, block_size, *, key, training=True):
    """Forward pass of DropBlock2D. x is NCHW, like the PyTorch module."""
    assert x.ndim == 4, 'Expected input with 4 dimensions (bsize, channels, height, width)'
    if (not training) or drop_prob == 0.0:
        return x                                     # eval / p==0 path: identity

    B, C, H, W = x.shape
    HW = H * W
    gamma = drop_prob / (block_size ** 2)
    lo, Hp, Wp = _padded_dims(H, W, block_size)

    # Uniform draw (torch.rand equivalent) generated directly at the pool-padded
    # shape so the kernel needs no jnp.pad / scatter: the halo is zeroed in-kernel
    # with an iota predicate.
    rand = jax.random.uniform(key, (B, Hp, Wp), dtype=jnp.float32)

    # ---- kernel 1: Bernoulli(gamma) seeds -> dilated block mask (+ partial sums)
    mb_budget = max(1, _MASK_TILE_BYTES // (Hp * Wp * 4))
    MB = _largest_divisor_at_most(B, min(mb_budget, max(1, B // 2)))
    Gm = B // MB
    mask_kernel = partial(_mask_kernel, H=H, W=W, bs=block_size, gamma=gamma)
    bm, sums = pl.pallas_call(
        mask_kernel,
        out_shape=(jax.ShapeDtypeStruct((B, H, W), jnp.float32),
                   jax.ShapeDtypeStruct((Gm, 1, 128), jnp.float32)),
        grid_spec=pltpu.PrefetchScalarGridSpec(
            num_scalar_prefetch=0,
            grid=(Gm,),
            in_specs=[pl.BlockSpec((MB, Hp, Wp), lambda g: (g, 0, 0))],
            out_specs=(pl.BlockSpec((MB, H, W), lambda g: (g, 0, 0)),
                       pl.BlockSpec((1, 1, 128), lambda g: (g, 0, 0)))),
        compiler_params=pltpu.CompilerParams(dimension_semantics=("parallel",)),
    )(rand)

    # Global renormalisation scalar: numel / sum (tiny Gm-element reduce + divide).
    # NOTE: if every cell is dropped this divides by zero (inf) — same as PyTorch.
    total = jnp.sum(sums[:, 0, 0])
    scale = (jnp.float32(B * H * W) / total).reshape(1)

    # ---- kernel 2: out = x * (block_mask * scale), lane-dense over H*W
    CB = _pick_channel_block(C, HW, _APPLY_TILE_BYTES)       # VMEM guard for big C*HW
    Gc = C // CB
    tb_cap = B if Gc >= 2 else max(1, B // 2)                # keep >=2 steps (v7x: 2 TCs)
    tb_budget = max(1, _APPLY_TILE_BYTES // (CB * HW * 4))
    TB = _largest_divisor_at_most(B, min(tb_budget, tb_cap))
    Gb = B // TB

    x3 = x.reshape(B, C, HW)                                 # free, lane dim = H*W
    bm3 = bm.reshape(B, 1, HW)
    out3 = pl.pallas_call(
        _apply_kernel,
        out_shape=jax.ShapeDtypeStruct((B, C, HW), x.dtype),
        grid_spec=pltpu.PrefetchScalarGridSpec(
            num_scalar_prefetch=1,                           # scale lands in SMEM once
            grid=(Gb, Gc),
            in_specs=[pl.BlockSpec((TB, CB, HW), lambda b, c, s: (b, c, 0)),
                      pl.BlockSpec((TB, 1, HW), lambda b, c, s: (b, 0, 0))],
            out_specs=pl.BlockSpec((TB, CB, HW), lambda b, c, s: (b, c, 0))),
        compiler_params=pltpu.CompilerParams(
            dimension_semantics=("parallel", "parallel")),
    )(scale, x3, bm3)
    return out3.reshape(B, C, H, W)


# -------------------------------------- main ---------------------------------------

if __name__ == "__main__":
    drop_prob, block_size = 0.1, 3
    key_x, key_drop = jax.random.split(jax.random.PRNGKey(0))
    x = jax.random.normal(key_x, (2, 4, 16, 16), jnp.float32)          # NCHW

    out = dropblock2d(x, drop_prob, block_size, key=key_drop, training=True)
    jax.block_until_ready(out)
    assert out.shape == x.shape

    # Pure-JAX reference consuming the exact same uniform draw.
    B, C, H, W = x.shape
    gamma = drop_prob / block_size ** 2
    lo, Hp, Wp = _padded_dims(H, W, block_size)
    rand = jax.random.uniform(key_drop, (B, Hp, Wp), dtype=jnp.float32)
    ri = jnp.arange(Hp)[:, None]
    ci = jnp.arange(Wp)[None, :]
    interior = (ri >= lo) & (ri < lo + H) & (ci >= lo) & (ci < lo + W)
    seed_mask = jnp.where(interior[None, :, :] & (rand < gamma), 1.0, 0.0).astype(jnp.float32)
    pooled = lax.reduce_window(seed_mask, -jnp.inf, lax.max,
                               (1, block_size, block_size), (1, 1, 1), "VALID")
    bm_ref = 1.0 - pooled
    assert bool(jnp.all((bm_ref == 0.0) | (bm_ref == 1.0)))
    ref = x * bm_ref[:, None, :, :] * (B * H * W) / jnp.sum(bm_ref)
    assert bool(jnp.allclose(out, ref, rtol=1e-5, atol=1e-5)), "mismatch vs reference"

    # Eval-mode / drop_prob==0 path is the identity, as in the PyTorch module.
    out_eval = dropblock2d(x, drop_prob, block_size, key=key_drop, training=False)
    assert bool(jnp.all(out_eval == x))

    print("KERNEL_OK")
</pallas_src>

<mosaic_0001>
module attributes {stable_mosaic.version = 11 : i64} {
  func.func @_mask_kernel(%arg0: i32, %arg1: memref<1x18x18xf32, #tpu.memory_space<vmem>>, %arg2: memref<1x16x16xf32, #tpu.memory_space<vmem>>, %arg3: memref<1x1x128xf32, #tpu.memory_space<vmem>>) attributes {dimension_semantics = [#tpu.dimension_semantics<parallel>], iteration_bounds = array<i64: 2>, scalar_prefetch = 0 : i64, scratch_operands = 0 : i64, tpu.core_type = #tpu.core_type<tc>, window_params = [{transform_indices = @transform_0, window_bounds = array<i64: 1, 18, 18>}, {transform_indices = @transform_1, window_bounds = array<i64: 1, 16, 16>}, {transform_indices = @transform_2, window_bounds = array<i64: 1, 1, 128>}]} {
    %c0 = arith.constant 0 : index
    %c0_0 = arith.constant 0 : index
    %c0_1 = arith.constant 0 : index
    %0 = vector.load %arg1[%c0, %c0_0, %c0_1] : memref<1x18x18xf32, #tpu.memory_space<vmem>>, vector<1x18x18xf32>
    %1 = tpu.iota {dimensions = array<i32: 1>} : vector<1x18x18xi32>
    %2 = tpu.iota {dimensions = array<i32: 2>} : vector<1x18x18xi32>
    %c1_i32 = arith.constant 1 : i32
    %3 = vector.broadcast %c1_i32 : i32 to vector<1x18x18xi32>
    %4 = arith.cmpi sge, %1, %3 : vector<1x18x18xi32>
    %c17_i32 = arith.constant 17 : i32
    %5 = vector.broadcast %c17_i32 : i32 to vector<1x18x18xi32>
    %6 = arith.cmpi slt, %1, %5 : vector<1x18x18xi32>
    %7 = arith.andi %4, %6 : vector<1x18x18xi1>
    %c1_i32_2 = arith.constant 1 : i32
    %8 = vector.broadcast %c1_i32_2 : i32 to vector<1x18x18xi32>
    %9 = arith.cmpi sge, %2, %8 : vector<1x18x18xi32>
    %10 = arith.andi %7, %9 : vector<1x18x18xi1>
    %c17_i32_3 = arith.constant 17 : i32
    %11 = vector.broadcast %c17_i32_3 : i32 to vector<1x18x18xi32>
    %12 = arith.cmpi slt, %2, %11 : vector<1x18x18xi32>
    %13 = arith.andi %10, %12 : vector<1x18x18xi1>
    %cst = arith.constant 0.0111111114 : f32
    %14 = vector.broadcast %cst : f32 to vector<1x18x18xf32>
    %15 = arith.cmpf olt, %0, %14 : vector<1x18x18xf32>
    %16 = arith.andi %13, %15 : vector<1x18x18xi1>
    %cst_4 = arith.constant 1.000000e+00 : f32
    %cst_5 = arith.constant 0.000000e+00 : f32
    %17 = vector.broadcast %cst_4 : f32 to vector<1x18x18xf32>
    %18 = vector.broadcast %cst_5 : f32 to vector<1x18x18xf32>
    %19 = arith.select %16, %17, %18 : vector<1x18x18xi1>, vector<1x18x18xf32>
    %20 = vector.extract_strided_slice %19 {offsets = [0, 0, 0], sizes = [1, 16, 18], strides = [1, 1, 1]} : vector<1x18x18xf32> to vector<1x16x18xf32>
    %21 = vector.extract_strided_slice %19 {offsets = [0, 1, 0], sizes = [1, 16, 18], strides = [1, 1, 1]} : vector<1x18x18xf32> to vector<1x16x18xf32>
    %22 = arith.maximumf %20, %21 : vector<1x16x18xf32>
    %23 = vector.extract_strided_slice %19 {offsets = [0, 2, 0], sizes = [1, 16, 18], strides = [1, 1, 1]} : vector<1x18x18xf32> to vector<1x16x18xf32>
    %24 = arith.maximumf %22, %23 : vector<1x16x18xf32>
    %25 = vector.extract_strided_slice %24 {offsets = [0, 0, 0], sizes = [1, 16, 16], strides = [1, 1, 1]} : vector<1x16x18xf32> to vector<1x16x16xf32>
    %26 = vector.extract_strided_slice %24 {offsets = [0, 0, 1], sizes = [1, 16, 16], strides = [1, 1, 1]} : vector<1x16x18xf32> to vector<1x16x16xf32>
    %27 = arith.maximumf %25, %26 : vector<1x16x16xf32>
    %28 = vector.extract_strided_slice %24 {offsets = [0, 0, 2], sizes = [1, 16, 16], strides = [1, 1, 1]} : vector<1x16x18xf32> to vector<1x16x16xf32>
    %29 = arith.maximumf %27, %28 : vector<1x16x16xf32>
    %cst_6 = arith.constant 1.000000e+00 : f32
    %30 = vector.broadcast %cst_6 : f32 to vector<1x16x16xf32>
    %31 = arith.subf %30, %29 : vector<1x16x16xf32>
    %c0_7 = arith.constant 0 : index
    %c0_8 = arith.constant 0 : index
    %c0_9 = arith.constant 0 : index
    %32 = vector.load %arg2[%c0_7, %c0_8, %c0_9] : memref<1x16x16xf32, #tpu.memory_space<vmem>>, vector<1x16x16xf32>
    tpu.vector_store %arg2[%c0_7, %c0_8, %c0_9], %31 {strides = array<i32>} : memref<1x16x16xf32, #tpu.memory_space<vmem>>, vector<1x16x16xf32>,
    %cst_10 = arith.constant dense<0.000000e+00> : vector<1x16xf32>
    %33 = vector.multi_reduction <add>, %31, %cst_10 [2] : vector<1x16x16xf32> to vector<1x16xf32>
    %34 = vector.shape_cast %33 : vector<1x16xf32> to vector<1x16x1xf32>
    %cst_11 = arith.constant dense<0.000000e+00> : vector<1x1xf32>
    %35 = vector.multi_reduction <add>, %34, %cst_11 [1] : vector<1x16x1xf32> to vector<1x1xf32>
    %36 = vector.shape_cast %35 : vector<1x1xf32> to vector<1x1x1xf32>
    %cst_12 = arith.constant dense<0.000000e+00> : vector<1x1xf32>
    %37 = vector.multi_reduction <add>, %36, %cst_12 [0] : vector<1x1x1xf32> to vector<1x1xf32>
    %38 = vector.shape_cast %37 : vector<1x1xf32> to vector<1x1x1xf32>
    %cst_13 = arith.constant 0.000000e+00 : f32
    %39 = vector.broadcast %cst_13 : f32 to vector<1x1x128xf32>
    %40 = vector.broadcast %38 : vector<1x1x1xf32> to vector<1x1x128xf32>
    %41 = arith.addf %39, %40 : vector<1x1x128xf32>
    %c0_14 = arith.constant 0 : index
    %c0_15 = arith.constant 0 : index
    %c0_16 = arith.constant 0 : index
    %42 = vector.load %arg3[%c0_14, %c0_15, %c0_16] : memref<1x1x128xf32, #tpu.memory_space<vmem>>, vector<1x1x128xf32>
    tpu.vector_store %arg3[%c0_14, %c0_15, %c0_16], %41 {strides = array<i32>} : memref<1x1x128xf32, #tpu.memory_space<vmem>>, vector<1x1x128xf32>,
    return
  }
  func.func @transform_0(%arg0: i32) -> (i32, i32, i32) {
    %c0_i32 = arith.constant 0 : i32
    %c0_i32_0 = arith.constant 0 : i32
    %c0_i32_1 = arith.constant 0 : i32
    return %arg0, %c0_i32, %c0_i32_0 : i32, i32, i32
  }
  func.func @transform_1(%arg0: i32) -> (i32, i32, i32) {
    %c0_i32 = arith.constant 0 : i32
    %c0_i32_0 = arith.constant 0 : i32
    %c0_i32_1 = arith.constant 0 : i32
    return %arg0, %c0_i32, %c0_i32_0 : i32, i32, i32
  }
  func.func @transform_2(%arg0: i32) -> (i32, i32, i32) {
    %c0_i32 = arith.constant 0 : i32
    %c0_i32_0 = arith.constant 0 : i32
    %c0_i32_1 = arith.constant 0 : i32
    return %arg0, %c0_i32, %c0_i32_0 : i32, i32, i32
  }
}

</mosaic_0001>

<llo_original>
// kernel: tpu_custom_call.1
$region0: #{tpu_custom_call.1}
  #allocation0 [shape = 'u32[]', space=smem, size = 0x4, offset = 0x4, fixed_abs, tag = 'smem constant byte address 0x4 - core index']
  #allocation1 [shape = 'u32[144,128]{1,0:T(1,128)}', space=vmem, size = 0x12000, scoped, tag = 'internal scratch']
  %s0 = inlined_call_operand.vmem [shape: f32[2,18,18], index: 0, kind: input, shape index: {}]
  %s1 = inlined_call_operand.hbm [shape: f32[2,16,16], index: 1, kind: output, shape index: {0}]
  %s2 = inlined_call_operand.hbm [shape: f32[2,1,128], index: 2, kind: output, shape index: {1}]
  %3 = xla_tuple %s1, %s2
  %s4 = sld [smem:[#allocation0]]
  $region45: #{tpu_custom_call.1} parent=0
    _
  %s6 = ssub.s32 1, %s4
  %s7 = scalar_select 0, %s6, %s4
  $region1: #{tpu_custom_call.1} parent=0
    #allocation2 [shape = 'u8[16384]{0}', space=vmem, size = 0x4000, scoped, tag = 'output window, operand 0']
    #allocation3 [shape = 's32[2]{0}', space=sflag, size = 0x8, scoped, tag = 'scoped memory for tpu_custom_call.1']
    #allocation4 [shape = 'u8[1024]{0}', space=vmem, size = 0x400, scoped, tag = 'output window, operand 1']
    #allocation5 [shape = 's32[2]{0}', space=sflag, size = 0x8, scoped, tag = 'scoped memory for tpu_custom_call.1']
    %8 = vsyncpa [#allocation3], 0
    %s9 = scalar_lea.sflag [#allocation3], 1
    %10 = vsyncpa %s9, 0
    %11 = vsyncpa [#allocation5], 0
    %s12 = scalar_lea.sflag [#allocation5], 1
    %13 = vsyncpa %s12, 0
    loop: start=0, step=1, limit=4
    $region2: #{tpu_custom_call.1} parent=1 // loop_pre_header
      _
    $region3: #{tpu_custom_call.1} parent=1 // loop_header
      %s15 = sphi 0, %s19
      %p16 = scmp.ge.s32.totalorder %s15, 4
      %s25 = sphi 0, %s27
      %s28 = sphi 0, %s25
      %s29 = sphi 0, %s28
      %s45 = sphi 0, %s29
      %s51 = sphi 0, %s53
      %s54 = sphi 0, %s51
      %s55 = sphi 0, %s54
      %s71 = sphi 0, %s55
      %s77 = sphi 0, %s79
      %s80 = sphi 0, %s77
      %s81 = sphi 0, %s80
      %s97 = sphi 0, %s81
    $region4: #{tpu_custom_call.1} parent=1 // loop_header_branch
      %18 = sbr.rel (%p16) target = $region8
    $region5: #{tpu_custom_call.1} parent=1 // loop_body
      %s20 = ssub.s32 %s15, 1
      %s21 = ssub.s32 %s15, 2
      %s22 = sadd.s32 %s15, 1
      %s23 = ssub.s32 %s15, %s22
      %p24 = scmp.eq.s32.totalorder %s23, 0
      %s26 = sadd.s32 %s25, 1
      %s27 = scalar_select %p24, %s25, %s26
      %p30 = pneg %p24
      %p31 = scmp.eq.s32.totalorder %s15, 1
      %p32 = por %p30, %p31
      %p33 = scmp.ne.s32.totalorder %s25, %s28
      %p34 = scmp.eq.s32.totalorder %s15, 0
      %p35 = por %p33, %p34
      %p36 = scmp.ne.s32.totalorder %s25, %s28
      %p37 = scmp.eq.s32.totalorder %s20, 1
      %p38 = por %p36, %p37
      %p39 = scmp.ne.s32.totalorder %s28, %s29
      %p40 = scmp.eq.s32.totalorder %s20, 0
      %p41 = por %p39, %p40
      %p42 = scmp.ne.s32.totalorder %s28, %s29
      %p43 = scmp.eq.s32.totalorder %s21, 1
      %p44 = por %p42, %p43
      %p46 = scmp.ne.s32.totalorder %s29, %s45
      %p47 = scmp.eq.s32.totalorder %s21, 0
      %p48 = por %p46, %p47
      %s49 = ssub.s32 %s15, %s22
      %p50 = scmp.eq.s32.totalorder %s49, 0
      %s52 = sadd.s32 %s51, 1
      %s53 = scalar_select %p50, %s51, %s52
      %p56 = pneg %p50
      %p57 = scmp.eq.s32.totalorder %s15, 1
      %p58 = por %p56, %p57
      %p59 = scmp.ne.s32.totalorder %s51, %s54
      %p60 = scmp.eq.s32.totalorder %s15, 0
      %p61 = por %p59, %p60
      %p62 = scmp.ne.s32.totalorder %s51, %s54
      %p63 = scmp.eq.s32.totalorder %s20, 1
      %p64 = por %p62, %p63
      %p65 = scmp.ne.s32.totalorder %s54, %s55
      %p66 = scmp.eq.s32.totalorder %s20, 0
      %p67 = por %p65, %p66
      %p68 = scmp.ne.s32.totalorder %s54, %s55
      %p69 = scmp.eq.s32.totalorder %s21, 1
      %p70 = por %p68, %p69
      %p72 = scmp.ne.s32.totalorder %s55, %s71
      %p73 = scmp.eq.s32.totalorder %s21, 0
      %p74 = por %p72, %p73
      %s75 = ssub.s32 %s15, %s22
      %p76 = scmp.eq.s32.totalorder %s75, 0
      %s78 = sadd.s32 %s77, 1
      %s79 = scalar_select %p76, %s77, %s78
      %p82 = pneg %p76
      %p83 = scmp.eq.s32.totalorder %s15, 1
      %p84 = por %p82, %p83
      %p85 = scmp.ne.s32.totalorder %s77, %s80
      %p86 = scmp.eq.s32.totalorder %s15, 0
      %p87 = por %p85, %p86
      %p88 = scmp.ne.s32.totalorder %s77, %s80
      %p89 = scmp.eq.s32.totalorder %s20, 1
      %p90 = por %p88, %p89
      %p91 = scmp.ne.s32.totalorder %s80, %s81
      %p92 = scmp.eq.s32.totalorder %s20, 0
      %p93 = por %p91, %p92
      %p94 = scmp.ne.s32.totalorder %s80, %s81
      %p95 = scmp.eq.s32.totalorder %s21, 1
      %p96 = por %p94, %p95
      %p98 = scmp.ne.s32.totalorder %s81, %s97
      %p99 = scmp.eq.s32.totalorder %s21, 0
      %p100 = por %p98, %p99
      %p101 = scmp.le.s32.totalorder 1, %s15
      %p102 = scmp.lt.s32.totalorder %s15, 3
      %p103 = pnand %p101, %p102
      %p104 = pneg %p103
      // Predicated region
      $region9: #{tpu_custom_call.1} parent=5 // pred_check
        _
      $region10: #{tpu_custom_call.1} parent=5 // pred_check_branch
        %106 = sbr.rel (%p103) target = $region12
      $region11: #{tpu_custom_call.1} parent=5 // pred_region
        %s107 = ssub.s32 %s15, 1
      $region12: #{tpu_custom_call.1} parent=5 // pred_fallthru
        _
      %p108 = scmp.lt.s32.totalorder %s15, 2
      // Predicated region
      $region13: #{tpu_custom_call.1} parent=5 // pred_check
        %p109 = pneg %p108
      $region14: #{tpu_custom_call.1} parent=5 // pred_check_branch
        %111 = sbr.rel (%p109) target = $region16
      $region15: #{tpu_custom_call.1} parent=5 // pred_region
        // Predicated region
        $region17: #{tpu_custom_call.1} parent=15 // pred_check
          %p112 = pneg %p35
        $region18: #{tpu_custom_call.1} parent=15 // pred_check_branch
          %114 = sbr.rel (%p112) target = $region20
        $region19: #{tpu_custom_call.1} parent=15 // pred_region
          %p115 = scmp.lt.s32.totalorder %s15, 1
          %s116 = scalar_select %p115, %s15, 1
          %s117 = smul.addr %s116, 3
          %s118 = smul.addr %s117, 8
          %s119 = scalar_lea.vmem %s0, %s118
        $region20: #{tpu_custom_call.1} parent=15 // pred_fallthru
          _
      $region16: #{tpu_custom_call.1} parent=5 // pred_fallthru
        _
      %p120 = scmp.le.s32.totalorder 1, %s15
      %p121 = scmp.lt.s32.totalorder %s15, 3
      %p122 = pnand %p120, %p121
      %p123 = pneg %p122
      // Predicated region
      $region21: #{tpu_custom_call.1} parent=5 // pred_check
        _
      $region22: #{tpu_custom_call.1} parent=5 // pred_check_branch
        %125 = sbr.rel (%p122) target = $region24
      $region23: #{tpu_custom_call.1} parent=5 // pred_region
        %s126 = ssub.s32 %s15, 1
        %p127 = scmp.lt.s32.totalorder %s20, 1
        %s128 = scalar_select %p127, %s20, 1
        %s129 = smul.addr %s128, 3
        %s130 = smul.addr %s129, 8
        %s131 = scalar_lea.vmem %s0, %s130
        %p132 = pneg %p41
        %p133 = pneg %p38
        %p134 = pneg %p67
        %p135 = pneg %p64
        %s136 = sand.u32 %s54, 1
        %s137 = scalar_lea.sflag [#allocation3], %s136
        %s138 = sand.u32 %s54, 1
        %s139 = smul.addr %s138, 16
        %s140 = scalar_lea.vmem [#allocation2], %s139
        %p141 = pneg %p93
        %p142 = pneg %p90
        %s143 = sand.u32 %s80, 1
        %s144 = scalar_lea.sflag [#allocation5], %s143
        %s145 = sand.u32 %s80, 1
        %s146 = scalar_lea.vmem [#allocation4], %s145
        %p147 = scmp.lt.s32.totalorder %s20, 1
        %s148 = scalar_select %p147, %s20, 1
        %s149 = smul.addr %s148, 3
        %s150 = smul.addr %s149, 8
        %s151 = scalar_lea.vmem %s0, %s150
        %v152 = vld [vmem:[%s151] sm:$0xff]
        %v153 = vld [vmem:[%s151 + $0x8] sm:$0xff]
        %v154 = vld [vmem:[%s151 + $0x10] sm:$0x3]
        %v155 = vlaneseq
        %v156 = vshrl.u32 %v155, 7
        %v157 = vadd.s32 %v156, 8
        %v158 = vadd.s32 %v156, 16
        %v159 = vlaneseq
        %v160 = vand.u32 %v159, 127
        %vm161 = vcmp.ge.s32.totalorder %v156, 1
        %vm162 = vcmp.ge.s32.totalorder %v157, 1
        %vm163 = vcmp.ge.s32.totalorder %v158, 1
        %vm164 = vcmp.lt.s32.totalorder %v156, 17
        %vm165 = vcmp.lt.s32.totalorder %v157, 17
        %vm166 = vcmp.lt.s32.totalorder %v158, 17
        %vm167 = vmand %vm161, %vm164
        %vm168 = vmand %vm162, %vm165
        %vm169 = vmand %vm163, %vm166
        %vm170 = vcmp.ge.s32.totalorder %v160, 1
        %vm171 = vmand %vm167, %vm170
        %vm172 = vmand %vm168, %vm170
        %vm173 = vmand %vm169, %vm170
        %vm174 = vcmp.lt.s32.totalorder %v160, 17
        %vm175 = vmand %vm171, %vm174
        %vm176 = vmand %vm172, %vm174
        %vm177 = vmand %vm173, %vm174
        %vm178 = vcmp.lt.f32.partialorder %v152, 0.011111111
        %vm179 = vcmp.lt.f32.partialorder %v153, 0.011111111
        %vm180 = vcmp.lt.f32.partialorder %v154, 0.011111111
        %vm181 = vmand %vm175, %vm178
        %vm182 = vmand %vm176, %vm179
        %vm183 = vmand %vm177, %vm180
        %v184 = vsel %vm181, 1.0, 0.0
        %v185 = vsel %vm182, 1.0, 0.0
        %v186 = vsel %vm183, 1.0, 0.0
        %vm190 = vcmask 1046528
        %v191 = vrot.slane %v184, 1
        %v192 = vrot.slane %v185, 1
        %v193 = vsel %vm190, %v191, %v192
        %v194 = vrot.slane %v186, 1
        %v195 = vsel %vm190, %v192, %v194
        %v198 = vmax.f32 %v184, %v193
        %v199 = vmax.f32 %v185, %v195
        %vm200 = vcmask 1045504
        %v201 = vrot.slane %v184, 2
        %v202 = vrot.slane %v185, 2
        %v203 = vsel %vm200, %v201, %v202
        %v204 = vrot.slane %v186, 2
        %v205 = vsel %vm200, %v202, %v204
        %v208 = vmax.f32 %v198, %v203
        %v209 = vmax.f32 %v199, %v205
        %212 = vrot.lane.b32.xlu0 %v208, 127
        %v213 = vpop.permute.xlu0 %212
        %214 = vrot.lane.b32.xlu0 %v209, 127
        %v215 = vpop.permute.xlu0 %214
        %v218 = vmax.f32 %v208, %v213
        %v219 = vmax.f32 %v209, %v215
        %220 = vrot.lane.b32.xlu0 %v208, 126
        %v221 = vpop.permute.xlu0 %220
        %222 = vrot.lane.b32.xlu0 %v209, 126
        %v223 = vpop.permute.xlu0 %222
        %v226 = vmax.f32 %v218, %v221
        %v227 = vmax.f32 %v219, %v223
        %v228 = vsub.f32 1.0, %v226
        %v229 = vsub.f32 1.0, %v227
        %vm230 = vcmask 130048
        %231 = vst.msk [vmem:[%s140] sm:$0xff] %vm230, %v228
        %232 = vst.msk [vmem:[%s140 + $0x8] sm:$0xff] %vm230, %v229
        %v233 = vsel %vm230, %v228, 0.0
        %234 = vadd.xlane.f32.xlu0 %v233
        %v235 = vpop.xlane.xlu0 %234
        %v236 = vsel %vm230, %v229, 0.0
        %237 = vadd.xlane.f32.xlu0 %v236
        %v238 = vpop.xlane.xlu0 %237
        %v239 = vadd.f32 %v235, %v238
        %v240 = vrot.slane %v239, 4
        %v241 = vadd.f32 %v239, %v240
        %v242 = vrot.slane %v241, 2
        %v243 = vadd.f32 %v241, %v242
        %v244 = vrot.slane %v243, 1
        %v245 = vadd.f32 %v243, %v244
        %v246 = vadd.f32 %v245, 0.0
        %v247 = vadd.f32 %v246, 0.0
        %248 = vst [vmem:[%s146] sm:$0x1] %v247
        %s249 = sand.u32 %s54, 1
        %s250 = scalar_lea.sflag [#allocation3], %s249
        %s251 = sand.u32 %s54, 1
        %s252 = smul.addr %s251, 16
        %s253 = scalar_lea.vmem [#allocation2], %s252
        %s254 = sand.u32 %s80, 1
        %s255 = scalar_lea.sflag [#allocation5], %s254
        %s256 = sand.u32 %s80, 1
        %s257 = scalar_lea.vmem [#allocation4], %s256
        // Predicated region
        $region25: #{tpu_custom_call.1} parent=23 // pred_check
          %p258 = pneg %p64
        $region26: #{tpu_custom_call.1} parent=23 // pred_check_branch
          %260 = sbr.rel (%p258) target = $region28
        $region27: #{tpu_custom_call.1} parent=23 // pred_region
          %s262 = ssub.s32 256, 256
          %263 = vsyncadd %s250, %s262
          %s264 = smul.addr %s20, 2
          %s265 = smul.addr %s264, 128
          %s266 = scalar_lea.hbm %s1, %s265
          %s267 = sshll.u32 %s253, 4
          %s268 = int_to_ptr.vmem [resolvable:$true] %s267
          %273 = dma.vmem_to_hbm [thread:$0]  %s268, 256, %s266, %s250, 128, 128, 8
        $region28: #{tpu_custom_call.1} parent=23 // pred_fallthru
          _
        // Predicated region
        $region29: #{tpu_custom_call.1} parent=23 // pred_check
          %p274 = pneg %p90
        $region30: #{tpu_custom_call.1} parent=23 // pred_check_branch
          %276 = sbr.rel (%p274) target = $region32
        $region31: #{tpu_custom_call.1} parent=23 // pred_region
          %s278 = ssub.s32 16, 16
          %279 = vsyncadd %s255, %s278
          %s280 = smul.addr %s20, 16
          %s281 = scalar_lea.hbm %s2, %s280
          %s283 = sshll.u32 %s257, 4
          %s284 = int_to_ptr.vmem [resolvable:$true] %s283
          %286 = dma.vmem_to_hbm [thread:$0]  %s284, 16, %s281, %s255
        $region32: #{tpu_custom_call.1} parent=23 // pred_fallthru
          _
      $region24: #{tpu_custom_call.1} parent=5 // pred_fallthru
        _
      %p287 = scmp.le.s32.totalorder 2, %s15
      // Predicated region
      $region33: #{tpu_custom_call.1} parent=5 // pred_check
        %p288 = pneg %p287
      $region34: #{tpu_custom_call.1} parent=5 // pred_check_branch
        %290 = sbr.rel (%p288) target = $region36
      $region35: #{tpu_custom_call.1} parent=5 // pred_region
        %s291 = ssub.s32 %s15, 2
        // Predicated region
        $region37: #{tpu_custom_call.1} parent=35 // pred_check
          %p292 = pneg %p70
        $region38: #{tpu_custom_call.1} parent=35 // pred_check_branch
          %294 = sbr.rel (%p292) target = $region40
        $region39: #{tpu_custom_call.1} parent=35 // pred_region
          %s295 = sand.u32 %s55, 1
          %s296 = scalar_lea.sflag [#allocation3], %s295
          %s297 = sand.u32 %s55, 1
          %s298 = smul.addr %s297, 16
          %s299 = scalar_lea.vmem [#allocation2], %s298
          %300 = dma.done %s296, 256
        $region40: #{tpu_custom_call.1} parent=35 // pred_fallthru
          _
        // Predicated region
        $region41: #{tpu_custom_call.1} parent=35 // pred_check
          %p301 = pneg %p96
        $region42: #{tpu_custom_call.1} parent=35 // pred_check_branch
          %303 = sbr.rel (%p301) target = $region44
        $region43: #{tpu_custom_call.1} parent=35 // pred_region
          %s304 = sand.u32 %s81, 1
          %s305 = scalar_lea.sflag [#allocation5], %s304
          %s306 = sand.u32 %s81, 1
          %s307 = scalar_lea.vmem [#allocation4], %s306
          %308 = dma.done %s305, 16
        $region44: #{tpu_custom_call.1} parent=35 // pred_fallthru
          _
      $region36: #{tpu_custom_call.1} parent=5 // pred_fallthru
        _
    $region6: #{tpu_custom_call.1} parent=1 // loop_footer
      %s19 = sadd.s32 1, %s15
    $region7: #{tpu_custom_call.1} parent=1 // loop_footer_branch
      %14 = sbr.rel target = $region3
    $region8: #{tpu_custom_call.1} parent=1 // loop_exit
      _
    %309 = vsyncpa [#allocation3], 1
    %s310 = scalar_lea.sflag [#allocation3], 1
    %311 = vsyncpa %s310, 1
    %312 = vsyncpa [#allocation5], 1
    %s313 = scalar_lea.sflag [#allocation5], 1
    %314 = vsyncpa %s313, 1

</llo_original>
